<compile_context>
chip_gen: v7x
topology: tpu7x:2x2x1
jax: 0.10.0
libtpu: 0.0.40
codegen_flags: <defaults>
</compile_context>

<pallas_src>
import jax
import jax.numpy as jnp
from jax.experimental import pallas as pl
from jax.experimental.pallas import tpu as pltpu

OUT_CHANNELS = 64
MAX_TILE_HW = 2048  # lane-axis spatial tile (multiple of 128)


def conv1x1_kernel(x_ref, w_ref, b_ref, o_ref):
    # x_ref: (1, 1, T)   w_ref: (64, 1)   b_ref: (64, 1)   o_ref: (1, 64, T)
    x = x_ref[0]                                   # (1, T), pixels on lanes
    o_ref[0] = x * w_ref[...] + b_ref[...]         # (64,1)*(1,T)+(64,1) -> (64,T)


def _round_up(v, m):
    return (v + m - 1) // m * m


def conv1x1_pallas(x_nchw, weight, bias):
    """1x1 conv with in_channels=1, out_channels=64.  x_nchw: (N, 1, H, W)."""
    N, C, H, W = x_nchw.shape
    assert C == 1
    HW = H * W

    # Lane-dense spatial-last layout; pad HW up to a multiple of the tile so
    # arbitrary H/W are handled (padded lanes are sliced off afterwards).
    tile = min(MAX_TILE_HW, _round_up(HW, 128))
    HW_pad = _round_up(HW, tile)

    x_flat = x_nchw.reshape(N, 1, HW)
    if HW_pad != HW:
        x_flat = jnp.pad(x_flat, ((0, 0), (0, 0), (0, HW_pad - HW)))

    w_col = weight.reshape(OUT_CHANNELS, 1).astype(x_nchw.dtype)  # (64, 1)
    b_col = bias.reshape(OUT_CHANNELS, 1).astype(x_nchw.dtype)    # (64, 1)

    M = N * HW
    cost = pl.CostEstimate(
        flops=2 * M * OUT_CHANNELS,
        transcendentals=0,
        bytes_accessed=int(x_nchw.dtype.itemsize) * M * (1 + OUT_CHANNELS),
    )

    out = pl.pallas_call(
        conv1x1_kernel,
        out_shape=jax.ShapeDtypeStruct((N, OUT_CHANNELS, HW_pad), x_nchw.dtype),
        grid_spec=pltpu.PrefetchScalarGridSpec(
            num_scalar_prefetch=0,
            grid=(N, HW_pad // tile),
            in_specs=[
                pl.BlockSpec((1, 1, tile), lambda n, j: (n, 0, j)),
                pl.BlockSpec((OUT_CHANNELS, 1), lambda n, j: (0, 0)),
                pl.BlockSpec((OUT_CHANNELS, 1), lambda n, j: (0, 0)),
            ],
            out_specs=pl.BlockSpec((1, OUT_CHANNELS, tile), lambda n, j: (n, 0, j)),
        ),
        compiler_params=pltpu.CompilerParams(
            dimension_semantics=("parallel", "parallel")),
        cost_estimate=cost,
    )(x_flat, w_col, b_col)

    if HW_pad != HW:
        out = out[:, :, :HW]
    return out.reshape(N, OUT_CHANNELS, H, W)


if __name__ == "__main__":
    key = jax.random.PRNGKey(0)
    kx, kw, kb = jax.random.split(key, 3)

    # deterministic "parameters" (shapes from nn.Conv2d(1, 64, kernel_size=1))
    weight = jax.random.normal(kw, (OUT_CHANNELS, 1, 1, 1), dtype=jnp.float32) * 0.1
    bias = jax.random.normal(kb, (OUT_CHANNELS,), dtype=jnp.float32) * 0.1

    # small input consistent with the module: NCHW, in_channels = 1
    x = jax.random.normal(kx, (2, 1, 16, 16), dtype=jnp.float32)

    out = conv1x1_pallas(x, weight, bias)
    out = jax.block_until_ready(out)

    # pure-JAX reference (same math as the 1x1 conv)
    ref = x * weight.reshape(1, OUT_CHANNELS, 1, 1) \
        + bias.reshape(1, OUT_CHANNELS, 1, 1)
    assert out.shape == (2, OUT_CHANNELS, 16, 16)
    assert jnp.allclose(out, ref, atol=1e-5, rtol=1e-5)

    print("KERNEL_OK")
</pallas_src>

<mosaic_0001>
module attributes {stable_mosaic.version = 11 : i64} {
  func.func @conv1x1_kernel(%arg0: i32, %arg1: i32, %arg2: memref<1x1x256xf32, #tpu.memory_space<vmem>>, %arg3: memref<64x1xf32, #tpu.memory_space<vmem>>, %arg4: memref<64x1xf32, #tpu.memory_space<vmem>>, %arg5: memref<1x64x256xf32, #tpu.memory_space<vmem>>) attributes {dimension_semantics = [#tpu.dimension_semantics<parallel>, #tpu.dimension_semantics<parallel>], iteration_bounds = array<i64: 2, 1>, scalar_prefetch = 0 : i64, scratch_operands = 0 : i64, tpu.core_type = #tpu.core_type<tc>, window_params = [{transform_indices = @transform_0, window_bounds = array<i64: 1, 1, 256>}, {pipeline_mode = #tpu.pipeline_mode<synchronous>, transform_indices = @transform_1, window_bounds = array<i64: 64, 1>}, {pipeline_mode = #tpu.pipeline_mode<synchronous>, transform_indices = @transform_2, window_bounds = array<i64: 64, 1>}, {transform_indices = @transform_3, window_bounds = array<i64: 1, 64, 256>}]} {
    %c0 = arith.constant 0 : index
    %c0_0 = arith.constant 0 : index
    %c0_1 = arith.constant 0 : index
    %0 = vector.load %arg2[%c0, %c0_0, %c0_1] : memref<1x1x256xf32, #tpu.memory_space<vmem>>, vector<1x1x256xf32>
    %1 = vector.shape_cast %0 : vector<1x1x256xf32> to vector<1x256xf32>
    %c0_2 = arith.constant 0 : index
    %c0_3 = arith.constant 0 : index
    %2 = vector.load %arg3[%c0_2, %c0_3] : memref<64x1xf32, #tpu.memory_space<vmem>>, vector<64x1xf32>
    %3 = vector.broadcast %1 : vector<1x256xf32> to vector<64x256xf32>
    %4 = vector.broadcast %2 : vector<64x1xf32> to vector<64x256xf32>
    %5 = arith.mulf %3, %4 : vector<64x256xf32>
    %c0_4 = arith.constant 0 : index
    %c0_5 = arith.constant 0 : index
    %6 = vector.load %arg4[%c0_4, %c0_5] : memref<64x1xf32, #tpu.memory_space<vmem>>, vector<64x1xf32>
    %7 = vector.broadcast %6 : vector<64x1xf32> to vector<64x256xf32>
    %8 = arith.addf %5, %7 : vector<64x256xf32>
    %c0_6 = arith.constant 0 : index
    %c0_7 = arith.constant 0 : index
    %c0_8 = arith.constant 0 : index
    %9 = vector.load %arg5[%c0_6, %c0_7, %c0_8] : memref<1x64x256xf32, #tpu.memory_space<vmem>>, vector<1x64x256xf32>
    %10 = vector.shape_cast %9 : vector<1x64x256xf32> to vector<64x256xf32>
    %11 = vector.shape_cast %8 : vector<64x256xf32> to vector<1x64x256xf32>
    tpu.vector_store %arg5[%c0_6, %c0_7, %c0_8], %11 {strides = array<i32>} : memref<1x64x256xf32, #tpu.memory_space<vmem>>, vector<1x64x256xf32>,
    return
  }
  func.func @transform_0(%arg0: i32, %arg1: i32) -> (i32, i32, i32) {
    %c0_i32 = arith.constant 0 : i32
    %c0_i32_0 = arith.constant 0 : i32
    return %arg0, %c0_i32, %arg1 : i32, i32, i32
  }
  func.func @transform_1(%arg0: i32, %arg1: i32) -> (i32, i32) {
    %c0_i32 = arith.constant 0 : i32
    %c0_i32_0 = arith.constant 0 : i32
    %c0_i32_1 = arith.constant 0 : i32
    return %c0_i32, %c0_i32_0 : i32, i32
  }
  func.func @transform_2(%arg0: i32, %arg1: i32) -> (i32, i32) {
    %c0_i32 = arith.constant 0 : i32
    %c0_i32_0 = arith.constant 0 : i32
    %c0_i32_1 = arith.constant 0 : i32
    return %c0_i32, %c0_i32_0 : i32, i32
  }
  func.func @transform_3(%arg0: i32, %arg1: i32) -> (i32, i32, i32) {
    %c0_i32 = arith.constant 0 : i32
    %c0_i32_0 = arith.constant 0 : i32
    return %arg0, %c0_i32, %arg1 : i32, i32, i32
  }
}

</mosaic_0001>

<llo_original>
// kernel: tpu_custom_call.1
$region0: #{tpu_custom_call.1}
  #allocation0 [shape = 'u32[]', space=smem, size = 0x4, offset = 0x4, fixed_abs, tag = 'smem constant byte address 0x4 - core index']
  #allocation1 [shape = 'u32[144,128]{1,0:T(1,128)}', space=vmem, size = 0x12000, scoped, tag = 'internal scratch']
  %s0 = inlined_call_operand.vmem [shape: f32[2,1,256], index: 0, kind: input, shape index: {}]
  %s1 = inlined_call_operand.vmem [shape: f32[64,1], index: 1, kind: input, shape index: {}]
  %s2 = inlined_call_operand.vmem [shape: f32[64,1], index: 2, kind: input, shape index: {}]
  %s3 = inlined_call_operand.hbm [shape: f32[2,64,256], index: 3, kind: output, shape index: {}]
  %s4 = sld [smem:[#allocation0]]
  $region45: #{tpu_custom_call.1} parent=0
    _
  %s6 = ssub.s32 1, %s4
  %s7 = scalar_select 0, %s6, %s4
  $region1: #{tpu_custom_call.1} parent=0
    #allocation2 [shape = 'u8[131072]{0}', space=vmem, size = 0x20000, scoped, tag = 'output window, operand 0']
    #allocation3 [shape = 's32[2]{0}', space=sflag, size = 0x8, scoped, tag = 'scoped memory for tpu_custom_call.1']
    %8 = vsyncpa [#allocation3], 0
    %s9 = scalar_lea.sflag [#allocation3], 1
    %10 = vsyncpa %s9, 0
    loop: start=0, step=1, limit=4
    $region2: #{tpu_custom_call.1} parent=1 // loop_pre_header
      _
    $region3: #{tpu_custom_call.1} parent=1 // loop_header
      %s12 = sphi 0, %s16
      %p13 = scmp.ge.s32.totalorder %s12, 4
      %s19 = sphi 0, %s31
      %s20 = sphi 0, %s27
      %s21 = sphi 0, %s19
      %s22 = sphi 0, %s20
      %s23 = sphi 0, %s21
      %s24 = sphi 0, %s22
      %s36 = sphi 0, %s38
      %s39 = sphi 0, %s36
      %s40 = sphi 0, %s39
      %s56 = sphi 0, %s40
      %s60 = sphi 0, %s60
      %s62 = sphi 0, %s60
      %s63 = sphi 0, %s62
      %s77 = sphi 0, %s63
      %s81 = sphi 0, %s81
      %s83 = sphi 0, %s81
      %s84 = sphi 0, %s83
      %s98 = sphi 0, %s84
      %s106 = sphi 0, %s108
      %s109 = sphi 0, %s106
      %s110 = sphi 0, %s109
      %s126 = sphi 0, %s110
    $region4: #{tpu_custom_call.1} parent=1 // loop_header_branch
      %15 = sbr.rel (%p13) target = $region8
    $region5: #{tpu_custom_call.1} parent=1 // loop_body
      %s17 = ssub.s32 %s12, 1
      %s18 = ssub.s32 %s12, 2
      %s25 = sadd.s32 1, %s20
      %p26 = scmp.ge.s32.totalorder %s25, 1
      %s27 = scalar_select %p26, 0, %s25
      %s28 = sadd.s32 1, %s19
      %s29 = scalar_select %p26, %s28, %s19
      %p30 = scmp.ge.s32.totalorder %s29, 2
      %s31 = scalar_select %p30, 0, %s29
      %s32 = ssub.s32 %s19, %s31
      %s33 = ssub.s32 %s20, %s27
      %s34 = sor.u32 %s32, %s33
      %p35 = scmp.eq.s32.totalorder %s34, 0
      %s37 = sadd.s32 %s36, 1
      %s38 = scalar_select %p35, %s36, %s37
      %p41 = pneg %p35
      %p42 = scmp.eq.s32.totalorder %s12, 1
      %p43 = por %p41, %p42
      %p44 = scmp.ne.s32.totalorder %s36, %s39
      %p45 = scmp.eq.s32.totalorder %s12, 0
      %p46 = por %p44, %p45
      %p47 = scmp.ne.s32.totalorder %s36, %s39
      %p48 = scmp.eq.s32.totalorder %s17, 1
      %p49 = por %p47, %p48
      %p50 = scmp.ne.s32.totalorder %s39, %s40
      %p51 = scmp.eq.s32.totalorder %s17, 0
      %p52 = por %p50, %p51
      %p53 = scmp.ne.s32.totalorder %s39, %s40
      %p54 = scmp.eq.s32.totalorder %s18, 1
      %p55 = por %p53, %p54
      %p57 = scmp.ne.s32.totalorder %s40, %s56
      %p58 = scmp.eq.s32.totalorder %s18, 0
      %p59 = por %p57, %p58
      %s61 = sadd.s32 %s60, 1
      %p64 = scmp.eq.s32.totalorder %s12, 1
      %p65 = scmp.ne.s32.totalorder %s60, %s62
      %p66 = scmp.eq.s32.totalorder %s12, 0
      %p67 = por %p65, %p66
      %p68 = scmp.ne.s32.totalorder %s60, %s62
      %p69 = scmp.eq.s32.totalorder %s17, 1
      %p70 = por %p68, %p69
      %p71 = scmp.ne.s32.totalorder %s62, %s63
      %p72 = scmp.eq.s32.totalorder %s17, 0
      %p73 = por %p71, %p72
      %p74 = scmp.ne.s32.totalorder %s62, %s63
      %p75 = scmp.eq.s32.totalorder %s18, 1
      %p76 = por %p74, %p75
      %p78 = scmp.ne.s32.totalorder %s63, %s77
      %p79 = scmp.eq.s32.totalorder %s18, 0
      %p80 = por %p78, %p79
      %s82 = sadd.s32 %s81, 1
      %p85 = scmp.eq.s32.totalorder %s12, 1
      %p86 = scmp.ne.s32.totalorder %s81, %s83
      %p87 = scmp.eq.s32.totalorder %s12, 0
      %p88 = por %p86, %p87
      %p89 = scmp.ne.s32.totalorder %s81, %s83
      %p90 = scmp.eq.s32.totalorder %s17, 1
      %p91 = por %p89, %p90
      %p92 = scmp.ne.s32.totalorder %s83, %s84
      %p93 = scmp.eq.s32.totalorder %s17, 0
      %p94 = por %p92, %p93
      %p95 = scmp.ne.s32.totalorder %s83, %s84
      %p96 = scmp.eq.s32.totalorder %s18, 1
      %p97 = por %p95, %p96
      %p99 = scmp.ne.s32.totalorder %s84, %s98
      %p100 = scmp.eq.s32.totalorder %s18, 0
      %p101 = por %p99, %p100
      %s102 = ssub.s32 %s19, %s31
      %s103 = ssub.s32 %s20, %s27
      %s104 = sor.u32 %s102, %s103
      %p105 = scmp.eq.s32.totalorder %s104, 0
      %s107 = sadd.s32 %s106, 1
      %s108 = scalar_select %p105, %s106, %s107
      %p111 = pneg %p105
      %p112 = scmp.eq.s32.totalorder %s12, 1
      %p113 = por %p111, %p112
      %p114 = scmp.ne.s32.totalorder %s106, %s109
      %p115 = scmp.eq.s32.totalorder %s12, 0
      %p116 = por %p114, %p115
      %p117 = scmp.ne.s32.totalorder %s106, %s109
      %p118 = scmp.eq.s32.totalorder %s17, 1
      %p119 = por %p117, %p118
      %p120 = scmp.ne.s32.totalorder %s109, %s110
      %p121 = scmp.eq.s32.totalorder %s17, 0
      %p122 = por %p120, %p121
      %p123 = scmp.ne.s32.totalorder %s109, %s110
      %p124 = scmp.eq.s32.totalorder %s18, 1
      %p125 = por %p123, %p124
      %p127 = scmp.ne.s32.totalorder %s110, %s126
      %p128 = scmp.eq.s32.totalorder %s18, 0
      %p129 = por %p127, %p128
      %p130 = scmp.le.s32.totalorder 1, %s12
      %p131 = scmp.lt.s32.totalorder %s12, 3
      %p132 = pnand %p130, %p131
      %p133 = pneg %p132
      // Predicated region
      $region9: #{tpu_custom_call.1} parent=5 // pred_check
        _
      $region10: #{tpu_custom_call.1} parent=5 // pred_check_branch
        %135 = sbr.rel (%p132) target = $region12
      $region11: #{tpu_custom_call.1} parent=5 // pred_region
        %s136 = ssub.s32 %s12, 1
        // Predicated region
        $region13: #{tpu_custom_call.1} parent=11 // pred_check
          %p137 = pneg %p73
        $region14: #{tpu_custom_call.1} parent=11 // pred_check_branch
          %139 = sbr.rel (%p137) target = $region16
        $region15: #{tpu_custom_call.1} parent=11 // pred_region
          _
        $region16: #{tpu_custom_call.1} parent=11 // pred_fallthru
          _
        // Predicated region
        $region17: #{tpu_custom_call.1} parent=11 // pred_check
          %p140 = pneg %p94
        $region18: #{tpu_custom_call.1} parent=11 // pred_check_branch
          %142 = sbr.rel (%p140) target = $region20
        $region19: #{tpu_custom_call.1} parent=11 // pred_region
          _
        $region20: #{tpu_custom_call.1} parent=11 // pred_fallthru
          _
      $region12: #{tpu_custom_call.1} parent=5 // pred_fallthru
        _
      %p143 = scmp.lt.s32.totalorder %s12, 2
      // Predicated region
      $region21: #{tpu_custom_call.1} parent=5 // pred_check
        %p144 = pneg %p143
      $region22: #{tpu_custom_call.1} parent=5 // pred_check_branch
        %146 = sbr.rel (%p144) target = $region24
      $region23: #{tpu_custom_call.1} parent=5 // pred_region
        // Predicated region
        $region25: #{tpu_custom_call.1} parent=23 // pred_check
          %p147 = pneg %p46
        $region26: #{tpu_custom_call.1} parent=23 // pred_check_branch
          %149 = sbr.rel (%p147) target = $region28
        $region27: #{tpu_custom_call.1} parent=23 // pred_region
          %s150 = smul.u32 2, %s20
          %p151 = scmp.lt.s32.totalorder %s19, 1
          %s152 = scalar_select %p151, %s19, 1
          %p153 = scmp.lt.s32.totalorder %s150, 1
          %s154 = scalar_select %p153, %s150, 1
          %s155 = smul.addr %s152, 2
          %s156 = sadd.s32 %s154, %s155
          %s157 = scalar_lea.vmem %s0, %s156
          %s158 = smul.u32 2, %s20
        $region28: #{tpu_custom_call.1} parent=23 // pred_fallthru
          _
      $region24: #{tpu_custom_call.1} parent=5 // pred_fallthru
        _
      %p159 = scmp.le.s32.totalorder 1, %s12
      %p160 = scmp.lt.s32.totalorder %s12, 3
      %p161 = pnand %p159, %p160
      %p162 = pneg %p161
      // Predicated region
      $region29: #{tpu_custom_call.1} parent=5 // pred_check
        _
      $region30: #{tpu_custom_call.1} parent=5 // pred_check_branch
        %164 = sbr.rel (%p161) target = $region32
      $region31: #{tpu_custom_call.1} parent=5 // pred_region
        %s165 = ssub.s32 %s12, 1
        %s166 = smul.u32 2, %s22
        %p167 = scmp.lt.s32.totalorder %s21, 1
        %s168 = scalar_select %p167, %s21, 1
        %p169 = scmp.lt.s32.totalorder %s166, 1
        %s170 = scalar_select %p169, %s166, 1
        %s171 = smul.addr %s168, 2
        %s172 = sadd.s32 %s170, %s171
        %s173 = scalar_lea.vmem %s0, %s172
        %p174 = pneg %p52
        %p175 = pneg %p49
        %p176 = pneg %p73
        %p177 = pneg %p70
        %p178 = pneg %p94
        %p179 = pneg %p91
        %p180 = pneg %p122
        %p181 = pneg %p119
        %s182 = sand.u32 %s109, 1
        %s183 = scalar_lea.sflag [#allocation3], %s182
        %s184 = sand.u32 %s109, 1
        %s185 = smul.addr %s184, 128
        %s186 = scalar_lea.vmem [#allocation2], %s185
        %s187 = smul.u32 2, %s22
        %p188 = scmp.lt.s32.totalorder %s21, 1
        %s189 = scalar_select %p188, %s21, 1
        %p190 = scmp.lt.s32.totalorder %s187, 1
        %s191 = scalar_select %p190, %s187, 1
        %s192 = smul.addr %s189, 2
        %s193 = sadd.s32 %s191, %s192
        %s194 = scalar_lea.vmem %s0, %s193
        %s195 = smul.u32 2, %s22
        %s196 = smul.u32 2, %s22
        %v197 = vld [vmem:[%s194] sm:$0x3]
        %v198 = vld [vmem:[%s1] sm:$0xff]
        %v199 = vld [vmem:[%s1 + $0x8] sm:$0xff]
        %v200 = vld [vmem:[%s1 + $0x10] sm:$0xff]
        %v201 = vld [vmem:[%s1 + $0x18] sm:$0xff]
        %v202 = vld [vmem:[%s1 + $0x20] sm:$0xff]
        %v203 = vld [vmem:[%s1 + $0x28] sm:$0xff]
        %v204 = vld [vmem:[%s1 + $0x30] sm:$0xff]
        %v205 = vld [vmem:[%s1 + $0x38] sm:$0xff]
        %v207 = vlaneseq
        %v208 = vshrl.u32 %v207, 7
        %v209 = vsub.s32 0, %v208
        %v210 = vrot.slane %v197, %v209
        %v211 = vlaneseq
        %v212 = vshrl.u32 %v211, 7
        %v213 = vsub.s32 1, %v212
        %v214 = vrot.slane %v197, %v213
        %218 = vset.pattern.permute.xlu0 0
        %219 = vperm.xlu0 %218, %v198
        %v220 = vpop.permute.xlu0 %219
        %223 = vset.pattern.permute.xlu0 0
        %224 = vperm.xlu0 %223, %v199
        %v225 = vpop.permute.xlu0 %224
        %228 = vset.pattern.permute.xlu0 0
        %229 = vperm.xlu0 %228, %v200
        %v230 = vpop.permute.xlu0 %229
        %233 = vset.pattern.permute.xlu0 0
        %234 = vperm.xlu0 %233, %v201
        %v235 = vpop.permute.xlu0 %234
        %238 = vset.pattern.permute.xlu0 0
        %239 = vperm.xlu0 %238, %v202
        %v240 = vpop.permute.xlu0 %239
        %243 = vset.pattern.permute.xlu0 0
        %244 = vperm.xlu0 %243, %v203
        %v245 = vpop.permute.xlu0 %244
        %248 = vset.pattern.permute.xlu0 0
        %249 = vperm.xlu0 %248, %v204
        %v250 = vpop.permute.xlu0 %249
        %253 = vset.pattern.permute.xlu0 0
        %254 = vperm.xlu0 %253, %v205
        %v255 = vpop.permute.xlu0 %254
        %v257 = vmul.f32 %v210, %v220
        %v258 = vmul.f32 %v214, %v220
        %v259 = vmul.f32 %v210, %v225
        %v260 = vmul.f32 %v214, %v225
        %v261 = vmul.f32 %v210, %v230
        %v262 = vmul.f32 %v214, %v230
        %v263 = vmul.f32 %v210, %v235
        %v264 = vmul.f32 %v214, %v235
        %v265 = vmul.f32 %v210, %v240
        %v266 = vmul.f32 %v214, %v240
        %v267 = vmul.f32 %v210, %v245
        %v268 = vmul.f32 %v214, %v245
        %v269 = vmul.f32 %v210, %v250
        %v270 = vmul.f32 %v214, %v250
        %v271 = vmul.f32 %v210, %v255
        %v272 = vmul.f32 %v214, %v255
        %v273 = vld [vmem:[%s2] sm:$0xff]
        %v274 = vld [vmem:[%s2 + $0x8] sm:$0xff]
        %v275 = vld [vmem:[%s2 + $0x10] sm:$0xff]
        %v276 = vld [vmem:[%s2 + $0x18] sm:$0xff]
        %v277 = vld [vmem:[%s2 + $0x20] sm:$0xff]
        %v278 = vld [vmem:[%s2 + $0x28] sm:$0xff]
        %v279 = vld [vmem:[%s2 + $0x30] sm:$0xff]
        %v280 = vld [vmem:[%s2 + $0x38] sm:$0xff]
        %282 = vset.pattern.permute.xlu0 0
        %283 = vperm.xlu0 %282, %v273
        %v284 = vpop.permute.xlu0 %283
        %287 = vset.pattern.permute.xlu0 0
        %288 = vperm.xlu0 %287, %v274
        %v289 = vpop.permute.xlu0 %288
        %292 = vset.pattern.permute.xlu0 0
        %293 = vperm.xlu0 %292, %v275
        %v294 = vpop.permute.xlu0 %293
        %297 = vset.pattern.permute.xlu0 0
        %298 = vperm.xlu0 %297, %v276
        %v299 = vpop.permute.xlu0 %298
        %302 = vset.pattern.permute.xlu0 0
        %303 = vperm.xlu0 %302, %v277
        %v304 = vpop.permute.xlu0 %303
        %307 = vset.pattern.permute.xlu0 0
        %308 = vperm.xlu0 %307, %v278
        %v309 = vpop.permute.xlu0 %308
        %312 = vset.pattern.permute.xlu0 0
        %313 = vperm.xlu0 %312, %v279
        %v314 = vpop.permute.xlu0 %313
        %317 = vset.pattern.permute.xlu0 0
        %318 = vperm.xlu0 %317, %v280
        %v319 = vpop.permute.xlu0 %318
        %v321 = vadd.f32 %v257, %v284
        %v322 = vadd.f32 %v258, %v284
        %v323 = vadd.f32 %v259, %v289
        %v324 = vadd.f32 %v260, %v289
        %v325 = vadd.f32 %v261, %v294
        %v326 = vadd.f32 %v262, %v294
        %v327 = vadd.f32 %v263, %v299
        %v328 = vadd.f32 %v264, %v299
        %v329 = vadd.f32 %v265, %v304
        %v330 = vadd.f32 %v266, %v304
        %v331 = vadd.f32 %v267, %v309
        %v332 = vadd.f32 %v268, %v309
        %v333 = vadd.f32 %v269, %v314
        %v334 = vadd.f32 %v270, %v314
        %v335 = vadd.f32 %v271, %v319
        %v336 = vadd.f32 %v272, %v319
        %337 = vst [vmem:[%s186] sm:$0xff] %v321
        %338 = vst [vmem:[%s186 + $0x8] sm:$0xff] %v322
        %339 = vst [vmem:[%s186 + $0x10] sm:$0xff] %v323
        %340 = vst [vmem:[%s186 + $0x18] sm:$0xff] %v324
        %341 = vst [vmem:[%s186 + $0x20] sm:$0xff] %v325
        %342 = vst [vmem:[%s186 + $0x28] sm:$0xff] %v326
        %343 = vst [vmem:[%s186 + $0x30] sm:$0xff] %v327
        %344 = vst [vmem:[%s186 + $0x38] sm:$0xff] %v328
        %345 = vst [vmem:[%s186 + $0x40] sm:$0xff] %v329
        %346 = vst [vmem:[%s186 + $0x48] sm:$0xff] %v330
        %347 = vst [vmem:[%s186 + $0x50] sm:$0xff] %v331
        %348 = vst [vmem:[%s186 + $0x58] sm:$0xff] %v332
        %349 = vst [vmem:[%s186 + $0x60] sm:$0xff] %v333
        %350 = vst [vmem:[%s186 + $0x68] sm:$0xff] %v334
        %351 = vst [vmem:[%s186 + $0x70] sm:$0xff] %v335
        %352 = vst [vmem:[%s186 + $0x78] sm:$0xff] %v336
        %s353 = sand.u32 %s109, 1
        %s354 = scalar_lea.sflag [#allocation3], %s353
        %s355 = sand.u32 %s109, 1
        %s356 = smul.addr %s355, 128
        %s357 = scalar_lea.vmem [#allocation2], %s356
        // Predicated region
        $region33: #{tpu_custom_call.1} parent=31 // pred_check
          %p358 = pneg %p119
        $region34: #{tpu_custom_call.1} parent=31 // pred_check_branch
          %360 = sbr.rel (%p358) target = $region36
        $region35: #{tpu_custom_call.1} parent=31 // pred_region
          %s361 = smul.u32 2, %s22
          %s363 = ssub.s32 2048, 2048
          %364 = vsyncadd %s354, %s363
          %s365 = smul.addr %s21, 16
          %s366 = sadd.s32 %s361, %s365
          %s367 = smul.addr %s366, 128
          %s368 = scalar_lea.hbm %s3, %s367
          %s369 = sshll.u32 %s357, 4
          %s370 = int_to_ptr.vmem [resolvable:$true] %s369
          %375 = dma.vmem_to_hbm [thread:$0]  %s370, 2048, %s368, %s354, 256, 256, 16
        $region36: #{tpu_custom_call.1} parent=31 // pred_fallthru
          _
      $region32: #{tpu_custom_call.1} parent=5 // pred_fallthru
        _
      %p376 = scmp.le.s32.totalorder 2, %s12
      // Predicated region
      $region37: #{tpu_custom_call.1} parent=5 // pred_check
        %p377 = pneg %p376
      $region38: #{tpu_custom_call.1} parent=5 // pred_check_branch
        %379 = sbr.rel (%p377) target = $region40
      $region39: #{tpu_custom_call.1} parent=5 // pred_region
        %s380 = ssub.s32 %s12, 2
        // Predicated region
        $region41: #{tpu_custom_call.1} parent=39 // pred_check
          %p381 = pneg %p125
        $region42: #{tpu_custom_call.1} parent=39 // pred_check_branch
          %383 = sbr.rel (%p381) target = $region44
        $region43: #{tpu_custom_call.1} parent=39 // pred_region
          %s384 = sand.u32 %s110, 1
          %s385 = scalar_lea.sflag [#allocation3], %s384
          %s386 = sand.u32 %s110, 1
          %s387 = smul.addr %s386, 128
          %s388 = scalar_lea.vmem [#allocation2], %s387
          %389 = dma.done %s385, 2048
        $region44: #{tpu_custom_call.1} parent=39 // pred_fallthru
          _
      $region40: #{tpu_custom_call.1} parent=5 // pred_fallthru
        _
    $region6: #{tpu_custom_call.1} parent=1 // loop_footer
      %s16 = sadd.s32 1, %s12
    $region7: #{tpu_custom_call.1} parent=1 // loop_footer_branch
      %11 = sbr.rel target = $region3
    $region8: #{tpu_custom_call.1} parent=1 // loop_exit
      _
    %390 = vsyncpa [#allocation3], 1
    %s391 = scalar_lea.sflag [#allocation3], 1
    %392 = vsyncpa %s391, 1

</llo_original>
